<compile_context>
chip_gen: v6e
topology: v6e:2x2x1
jax: 0.10.0
libtpu: 0.0.40
codegen_flags: <defaults>
</compile_context>

<pallas_src>
import jax
import jax.numpy as jnp
from jax.experimental import pallas as pl
from jax.experimental.pallas import tpu as pltpu

EPS = 1e-5


# ---------------------------------------------------------------------------
# Fused kernel: input/output encoder transforms (emit x_norm / y_norm) and the
# wrapped 1x1-conv model (emits output), with normalization folded into the
# conv weights.  All sizes are static (read off the Refs).
# ---------------------------------------------------------------------------
def _fused_kernel(x_ref, y_ref, const_ref, out_ref, xn_ref, yn_ref):
    # x_ref:    (PCin,  TP)  pixel tile, `pack` batch elements stacked on sublanes
    # y_ref:    (PCout, TP)
    # const_ref:(rows, 5+PCin) packed constants:
    #            col 0: mu_in   col 1: 1/(sig_in+eps)
    #            col 2: mu_out  col 3: 1/(sig_out+eps)
    #            col 4: folded bias   cols 5.. : block-diag folded weight.T
    pcin = x_ref.shape[0]
    pcout = y_ref.shape[0]
    tp = x_ref.shape[1]

    c = const_ref[...]
    mu_in = c[:pcin, 0:1]
    isig_in = c[:pcin, 1:2]
    mu_out = c[:pcout, 2:3]
    isig_out = c[:pcout, 3:4]
    b_fold = c[:pcout, 4:5]
    wt2 = c[:pcout, 5:5 + pcin]          # block-diagonal (PCout, PCin)

    x = x_ref[...].astype(jnp.float32)
    y = y_ref[...].astype(jnp.float32)

    # data_dict['x'] = input_encoder.transform(x)
    xn_ref[...] = ((x - mu_in) * isig_in).astype(xn_ref.dtype)
    # data_dict['y'] = output_encoder.transform(y)   (train mode)
    yn_ref[...] = ((y - mu_out) * isig_out).astype(yn_ref.dtype)

    # output = model(x_norm): 1x1 conv == channel mix.  Normalization is folded
    # into (wt2, b_fold), so out[d,:] = sum_c wt2[d,c] * x[c,:] + b_fold[d].
    # PCin unrolled broadcast FMAs on the VPU; kernel is HBM-bound so the
    # zero-weight half of the block-diagonal product is free filler.
    acc = jnp.broadcast_to(b_fold, (pcout, tp))
    for cc in range(pcin):               # static, tiny unroll
        acc = acc + wt2[:, cc:cc + 1] * x[cc:cc + 1, :]
    out_ref[...] = acc.astype(out_ref.dtype)


def _choose_pixel_tile(hw, tile_p):
    """Largest lane tile <= tile_p that needs no padding (divides hw exactly)."""
    if hw <= tile_p:
        return hw                        # whole pixel axis: block dim == array dim
    if hw % 128 == 0:
        m = hw // 128
        for d in range(tile_p // 128, 0, -1):
            if m % d == 0 and 128 * d >= 1024:
                return 128 * d
    # Rare ragged case: one whole-row block (still padding-free).
    return hw


def data_processor_forward(x, y, params, *, tile_p=16384):
    """Pallas implementation of DataProcessor.forward(**{'x': x, 'y': y}).

    Returns (output, data_dict) with data_dict = {'x': x_norm, 'y': y_norm}.
    """
    mu_in, sig_in, w, b, mu_out, sig_out = (
        params["mu_in"], params["sig_in"], params["w"], params["b"],
        params["mu_out"], params["sig_out"],
    )

    n, c_in, h, wdt = x.shape
    c_out = w.shape[1]
    hw = h * wdt

    # --- Batch packing: fill the 8 f32 sublanes (C=4 -> pack 2 per block). ---
    pack = 2 if (n % 2 == 0) else 1
    nb = n // pack
    pcin, pcout = pack * c_in, pack * c_out

    # NCHW -> (N/pack, pack*C, H*W): pure contiguous reshapes, no transpose,
    # no extra HBM pass.
    x3 = x.reshape(nb, pcin, hw)
    y3 = y.reshape(nb, pcout, hw)

    # --- Pixel tile: big, multiple of 128, divides HW exactly (no pad/unpad). ---
    tp = _choose_pixel_tile(hw, tile_p)
    # Keep enough grid steps for pipelining / v7x's two TensorCores.
    while nb * (hw // tp) < 8 and tp % 256 == 0 and tp // 2 >= 2048:
        tp //= 2
    grid = (nb, hw // tp)

    # --- Fold input normalization into the 1x1 conv & pack all constants. ---
    f32 = jnp.float32
    mu_in = mu_in.astype(f32); sig_in = sig_in.astype(f32)
    mu_out = mu_out.astype(f32); sig_out = sig_out.astype(f32)
    w = w.astype(f32); b = b.astype(f32)

    inv_sig_in = 1.0 / (sig_in + EPS)
    inv_sig_out = 1.0 / (sig_out + EPS)
    w_fold_t = (inv_sig_in[:, None] * w).T           # (Cout, Cin)
    b_fold = b - (mu_in * inv_sig_in) @ w             # (Cout,)

    mu_in_p = jnp.tile(mu_in, pack)
    isig_in_p = jnp.tile(inv_sig_in, pack)
    mu_out_p = jnp.tile(mu_out, pack)
    isig_out_p = jnp.tile(inv_sig_out, pack)
    b_fold_p = jnp.tile(b_fold, pack)
    wt2 = jnp.kron(jnp.eye(pack, dtype=f32), w_fold_t)  # block-diag (PCout, PCin)

    rows = max(pcin, pcout)
    const = jnp.zeros((rows, 5 + pcin), f32)
    const = const.at[:pcin, 0].set(mu_in_p)
    const = const.at[:pcin, 1].set(isig_in_p)
    const = const.at[:pcout, 2].set(mu_out_p)
    const = const.at[:pcout, 3].set(isig_out_p)
    const = const.at[:pcout, 4].set(b_fold_p)
    const = const.at[:pcout, 5:].set(wt2)

    # --- VMEM budget: 5 streamed planes x double buffer x padded sublanes. ---
    rows8 = ((max(pcin, pcout) + 7) // 8) * 8
    vmem_est = 2 * 5 * rows8 * tp * 4
    cp_kwargs = dict(dimension_semantics=("parallel", "parallel"))
    if vmem_est > (12 << 20):
        cp_kwargs["vmem_limit_bytes"] = int(min(vmem_est * 1.5 + (2 << 20), 64 << 20))
    compiler_params = pltpu.CompilerParams(**cp_kwargs)

    block_const = lambda i, p: (0, 0)

    out3, xn3, yn3 = pl.pallas_call(
        _fused_kernel,
        out_shape=(
            jax.ShapeDtypeStruct((nb, pcout, hw), x.dtype),
            jax.ShapeDtypeStruct((nb, pcin, hw), x.dtype),
            jax.ShapeDtypeStruct((nb, pcout, hw), y.dtype),
        ),
        grid_spec=pltpu.PrefetchScalarGridSpec(
            num_scalar_prefetch=0,
            grid=grid,
            in_specs=[
                pl.BlockSpec((None, pcin, tp), lambda i, p: (i, 0, p)),
                pl.BlockSpec((None, pcout, tp), lambda i, p: (i, 0, p)),
                pl.BlockSpec((rows, 5 + pcin), block_const),
            ],
            out_specs=[
                pl.BlockSpec((None, pcout, tp), lambda i, p: (i, 0, p)),
                pl.BlockSpec((None, pcin, tp), lambda i, p: (i, 0, p)),
                pl.BlockSpec((None, pcout, tp), lambda i, p: (i, 0, p)),
            ],
        ),
        compiler_params=compiler_params,
    )(x3, y3, const)

    # postprocess in train mode: no inverse_transform; contiguous reshapes only.
    output = out3.reshape(n, c_out, h, wdt)
    x_norm = xn3.reshape(n, c_in, h, wdt)
    y_norm = yn3.reshape(n, c_out, h, wdt)
    data_dict = {"x": x_norm, "y": y_norm}
    return output, data_dict


def _reference(x, y, params):
    mu_in = params["mu_in"].reshape(1, -1, 1, 1)
    sig_in = params["sig_in"].reshape(1, -1, 1, 1)
    mu_out = params["mu_out"].reshape(1, -1, 1, 1)
    sig_out = params["sig_out"].reshape(1, -1, 1, 1)
    xn = (x - mu_in) / (sig_in + EPS)
    yn = (y - mu_out) / (sig_out + EPS)
    out = (jnp.einsum("nchw,cd->ndhw", xn, params["w"])
           + params["b"].reshape(1, -1, 1, 1))
    return out, xn, yn


if __name__ == "__main__":
    key = jax.random.PRNGKey(0)
    k_x, k_y, k_w = jax.random.split(key, 3)

    N, C_IN, H, W = 2, 4, 16, 16   # n_features = 4
    C_OUT = 4

    x = jax.random.normal(k_x, (N, C_IN, H, W), dtype=jnp.float32) * 2.0 + 1.0
    y = jax.random.normal(k_y, (N, C_OUT, H, W), dtype=jnp.float32) * 3.0 - 0.5

    # Deterministic "encoder" statistics and wrapped-model weights.
    params = {
        "mu_in": jnp.linspace(-0.5, 0.5, C_IN, dtype=jnp.float32),
        "sig_in": jnp.linspace(0.8, 1.6, C_IN, dtype=jnp.float32),
        "mu_out": jnp.linspace(-1.0, 1.0, C_OUT, dtype=jnp.float32),
        "sig_out": jnp.linspace(1.0, 2.0, C_OUT, dtype=jnp.float32),
        "w": (jax.random.normal(k_w, (C_IN, C_OUT), dtype=jnp.float32)
              / jnp.sqrt(C_IN)),
        "b": jnp.linspace(-0.1, 0.1, C_OUT, dtype=jnp.float32),
    }

    output, data_dict = data_processor_forward(x, y, params)
    output = jax.block_until_ready(output)
    data_dict = jax.tree_util.tree_map(jax.block_until_ready, data_dict)

    out_ref, xn_ref, yn_ref = _reference(x, y, params)
    assert output.shape == (N, C_OUT, H, W)
    assert jnp.allclose(output, out_ref, atol=1e-4, rtol=1e-4)
    assert jnp.allclose(data_dict["x"], xn_ref, atol=1e-5, rtol=1e-5)
    assert jnp.allclose(data_dict["y"], yn_ref, atol=1e-5, rtol=1e-5)

    print("KERNEL_OK")
</pallas_src>

<mosaic_0001>
module attributes {stable_mosaic.version = 11 : i64} {
  func.func @_fused_kernel(%arg0: i32, %arg1: i32, %arg2: memref<1x8x256xf32, #tpu.memory_space<vmem>>, %arg3: memref<1x8x256xf32, #tpu.memory_space<vmem>>, %arg4: memref<8x13xf32, #tpu.memory_space<vmem>>, %arg5: memref<1x8x256xf32, #tpu.memory_space<vmem>>, %arg6: memref<1x8x256xf32, #tpu.memory_space<vmem>>, %arg7: memref<1x8x256xf32, #tpu.memory_space<vmem>>) attributes {dimension_semantics = [#tpu.dimension_semantics<parallel>, #tpu.dimension_semantics<parallel>], iteration_bounds = array<i64: 1, 1>, scalar_prefetch = 0 : i64, scratch_operands = 0 : i64, tpu.core_type = #tpu.core_type<tc>, window_params = [{transform_indices = @transform_0, window_bounds = array<i64: 1, 8, 256>}, {transform_indices = @transform_1, window_bounds = array<i64: 1, 8, 256>}, {pipeline_mode = #tpu.pipeline_mode<synchronous>, transform_indices = @transform_2, window_bounds = array<i64: 8, 13>}, {transform_indices = @transform_3, window_bounds = array<i64: 1, 8, 256>}, {transform_indices = @transform_4, window_bounds = array<i64: 1, 8, 256>}, {transform_indices = @transform_5, window_bounds = array<i64: 1, 8, 256>}]} {
    %c0 = arith.constant 0 : index
    %c0_0 = arith.constant 0 : index
    %0 = vector.load %arg4[%c0, %c0_0] : memref<8x13xf32, #tpu.memory_space<vmem>>, vector<8x13xf32>
    %1 = vector.extract_strided_slice %0 {offsets = [0, 0], sizes = [8, 1], strides = [1, 1]} : vector<8x13xf32> to vector<8x1xf32>
    %2 = vector.extract_strided_slice %0 {offsets = [0, 1], sizes = [8, 1], strides = [1, 1]} : vector<8x13xf32> to vector<8x1xf32>
    %3 = vector.extract_strided_slice %0 {offsets = [0, 2], sizes = [8, 1], strides = [1, 1]} : vector<8x13xf32> to vector<8x1xf32>
    %4 = vector.extract_strided_slice %0 {offsets = [0, 3], sizes = [8, 1], strides = [1, 1]} : vector<8x13xf32> to vector<8x1xf32>
    %5 = vector.extract_strided_slice %0 {offsets = [0, 4], sizes = [8, 1], strides = [1, 1]} : vector<8x13xf32> to vector<8x1xf32>
    %6 = vector.extract_strided_slice %0 {offsets = [0, 5], sizes = [8, 8], strides = [1, 1]} : vector<8x13xf32> to vector<8x8xf32>
    %c0_1 = arith.constant 0 : index
    %c0_2 = arith.constant 0 : index
    %c0_3 = arith.constant 0 : index
    %7 = vector.load %arg2[%c0_1, %c0_2, %c0_3] : memref<1x8x256xf32, #tpu.memory_space<vmem>>, vector<1x8x256xf32>
    %8 = vector.shape_cast %7 : vector<1x8x256xf32> to vector<8x256xf32>
    %c0_4 = arith.constant 0 : index
    %c0_5 = arith.constant 0 : index
    %c0_6 = arith.constant 0 : index
    %9 = vector.load %arg3[%c0_4, %c0_5, %c0_6] : memref<1x8x256xf32, #tpu.memory_space<vmem>>, vector<1x8x256xf32>
    %10 = vector.shape_cast %9 : vector<1x8x256xf32> to vector<8x256xf32>
    %11 = vector.broadcast %1 : vector<8x1xf32> to vector<8x256xf32>
    %12 = arith.subf %8, %11 : vector<8x256xf32>
    %13 = vector.broadcast %2 : vector<8x1xf32> to vector<8x256xf32>
    %14 = arith.mulf %12, %13 : vector<8x256xf32>
    %c0_7 = arith.constant 0 : index
    %c0_8 = arith.constant 0 : index
    %c0_9 = arith.constant 0 : index
    %15 = vector.load %arg6[%c0_7, %c0_8, %c0_9] : memref<1x8x256xf32, #tpu.memory_space<vmem>>, vector<1x8x256xf32>
    %16 = vector.shape_cast %15 : vector<1x8x256xf32> to vector<8x256xf32>
    %17 = vector.shape_cast %14 : vector<8x256xf32> to vector<1x8x256xf32>
    tpu.vector_store %arg6[%c0_7, %c0_8, %c0_9], %17 {strides = array<i32>} : memref<1x8x256xf32, #tpu.memory_space<vmem>>, vector<1x8x256xf32>,
    %18 = vector.broadcast %3 : vector<8x1xf32> to vector<8x256xf32>
    %19 = arith.subf %10, %18 : vector<8x256xf32>
    %20 = vector.broadcast %4 : vector<8x1xf32> to vector<8x256xf32>
    %21 = arith.mulf %19, %20 : vector<8x256xf32>
    %c0_10 = arith.constant 0 : index
    %c0_11 = arith.constant 0 : index
    %c0_12 = arith.constant 0 : index
    %22 = vector.load %arg7[%c0_10, %c0_11, %c0_12] : memref<1x8x256xf32, #tpu.memory_space<vmem>>, vector<1x8x256xf32>
    %23 = vector.shape_cast %22 : vector<1x8x256xf32> to vector<8x256xf32>
    %24 = vector.shape_cast %21 : vector<8x256xf32> to vector<1x8x256xf32>
    tpu.vector_store %arg7[%c0_10, %c0_11, %c0_12], %24 {strides = array<i32>} : memref<1x8x256xf32, #tpu.memory_space<vmem>>, vector<1x8x256xf32>,
    %25 = vector.shape_cast %5 : vector<8x1xf32> to vector<8x1xf32>
    %26 = vector.broadcast %25 : vector<8x1xf32> to vector<8x256xf32>
    %27 = vector.extract_strided_slice %6 {offsets = [0, 0], sizes = [8, 1], strides = [1, 1]} : vector<8x8xf32> to vector<8x1xf32>
    %28 = vector.extract_strided_slice %8 {offsets = [0, 0], sizes = [1, 256], strides = [1, 1]} : vector<8x256xf32> to vector<1x256xf32>
    %29 = vector.broadcast %27 : vector<8x1xf32> to vector<8x256xf32>
    %30 = vector.broadcast %28 : vector<1x256xf32> to vector<8x256xf32>
    %31 = arith.mulf %29, %30 : vector<8x256xf32>
    %32 = arith.addf %26, %31 : vector<8x256xf32>
    %33 = vector.extract_strided_slice %6 {offsets = [0, 1], sizes = [8, 1], strides = [1, 1]} : vector<8x8xf32> to vector<8x1xf32>
    %34 = vector.extract_strided_slice %8 {offsets = [1, 0], sizes = [1, 256], strides = [1, 1]} : vector<8x256xf32> to vector<1x256xf32>
    %35 = vector.broadcast %33 : vector<8x1xf32> to vector<8x256xf32>
    %36 = vector.broadcast %34 : vector<1x256xf32> to vector<8x256xf32>
    %37 = arith.mulf %35, %36 : vector<8x256xf32>
    %38 = arith.addf %32, %37 : vector<8x256xf32>
    %39 = vector.extract_strided_slice %6 {offsets = [0, 2], sizes = [8, 1], strides = [1, 1]} : vector<8x8xf32> to vector<8x1xf32>
    %40 = vector.extract_strided_slice %8 {offsets = [2, 0], sizes = [1, 256], strides = [1, 1]} : vector<8x256xf32> to vector<1x256xf32>
    %41 = vector.broadcast %39 : vector<8x1xf32> to vector<8x256xf32>
    %42 = vector.broadcast %40 : vector<1x256xf32> to vector<8x256xf32>
    %43 = arith.mulf %41, %42 : vector<8x256xf32>
    %44 = arith.addf %38, %43 : vector<8x256xf32>
    %45 = vector.extract_strided_slice %6 {offsets = [0, 3], sizes = [8, 1], strides = [1, 1]} : vector<8x8xf32> to vector<8x1xf32>
    %46 = vector.extract_strided_slice %8 {offsets = [3, 0], sizes = [1, 256], strides = [1, 1]} : vector<8x256xf32> to vector<1x256xf32>
    %47 = vector.broadcast %45 : vector<8x1xf32> to vector<8x256xf32>
    %48 = vector.broadcast %46 : vector<1x256xf32> to vector<8x256xf32>
    %49 = arith.mulf %47, %48 : vector<8x256xf32>
    %50 = arith.addf %44, %49 : vector<8x256xf32>
    %51 = vector.extract_strided_slice %6 {offsets = [0, 4], sizes = [8, 1], strides = [1, 1]} : vector<8x8xf32> to vector<8x1xf32>
    %52 = vector.extract_strided_slice %8 {offsets = [4, 0], sizes = [1, 256], strides = [1, 1]} : vector<8x256xf32> to vector<1x256xf32>
    %53 = vector.broadcast %51 : vector<8x1xf32> to vector<8x256xf32>
    %54 = vector.broadcast %52 : vector<1x256xf32> to vector<8x256xf32>
    %55 = arith.mulf %53, %54 : vector<8x256xf32>
    %56 = arith.addf %50, %55 : vector<8x256xf32>
    %57 = vector.extract_strided_slice %6 {offsets = [0, 5], sizes = [8, 1], strides = [1, 1]} : vector<8x8xf32> to vector<8x1xf32>
    %58 = vector.extract_strided_slice %8 {offsets = [5, 0], sizes = [1, 256], strides = [1, 1]} : vector<8x256xf32> to vector<1x256xf32>
    %59 = vector.broadcast %57 : vector<8x1xf32> to vector<8x256xf32>
    %60 = vector.broadcast %58 : vector<1x256xf32> to vector<8x256xf32>
    %61 = arith.mulf %59, %60 : vector<8x256xf32>
    %62 = arith.addf %56, %61 : vector<8x256xf32>
    %63 = vector.extract_strided_slice %6 {offsets = [0, 6], sizes = [8, 1], strides = [1, 1]} : vector<8x8xf32> to vector<8x1xf32>
    %64 = vector.extract_strided_slice %8 {offsets = [6, 0], sizes = [1, 256], strides = [1, 1]} : vector<8x256xf32> to vector<1x256xf32>
    %65 = vector.broadcast %63 : vector<8x1xf32> to vector<8x256xf32>
    %66 = vector.broadcast %64 : vector<1x256xf32> to vector<8x256xf32>
    %67 = arith.mulf %65, %66 : vector<8x256xf32>
    %68 = arith.addf %62, %67 : vector<8x256xf32>
    %69 = vector.extract_strided_slice %6 {offsets = [0, 7], sizes = [8, 1], strides = [1, 1]} : vector<8x8xf32> to vector<8x1xf32>
    %70 = vector.extract_strided_slice %8 {offsets = [7, 0], sizes = [1, 256], strides = [1, 1]} : vector<8x256xf32> to vector<1x256xf32>
    %71 = vector.broadcast %69 : vector<8x1xf32> to vector<8x256xf32>
    %72 = vector.broadcast %70 : vector<1x256xf32> to vector<8x256xf32>
    %73 = arith.mulf %71, %72 : vector<8x256xf32>
    %74 = arith.addf %68, %73 : vector<8x256xf32>
    %c0_13 = arith.constant 0 : index
    %c0_14 = arith.constant 0 : index
    %c0_15 = arith.constant 0 : index
    %75 = vector.load %arg5[%c0_13, %c0_14, %c0_15] : memref<1x8x256xf32, #tpu.memory_space<vmem>>, vector<1x8x256xf32>
    %76 = vector.shape_cast %75 : vector<1x8x256xf32> to vector<8x256xf32>
    %77 = vector.shape_cast %74 : vector<8x256xf32> to vector<1x8x256xf32>
    tpu.vector_store %arg5[%c0_13, %c0_14, %c0_15], %77 {strides = array<i32>} : memref<1x8x256xf32, #tpu.memory_space<vmem>>, vector<1x8x256xf32>,
    return
  }
  func.func @transform_0(%arg0: i32, %arg1: i32) -> (i32, i32, i32) {
    %c0_i32 = arith.constant 0 : i32
    %c0_i32_0 = arith.constant 0 : i32
    return %arg0, %c0_i32, %arg1 : i32, i32, i32
  }
  func.func @transform_1(%arg0: i32, %arg1: i32) -> (i32, i32, i32) {
    %c0_i32 = arith.constant 0 : i32
    %c0_i32_0 = arith.constant 0 : i32
    return %arg0, %c0_i32, %arg1 : i32, i32, i32
  }
  func.func @transform_2(%arg0: i32, %arg1: i32) -> (i32, i32) {
    %c0_i32 = arith.constant 0 : i32
    %c0_i32_0 = arith.constant 0 : i32
    %c0_i32_1 = arith.constant 0 : i32
    return %c0_i32, %c0_i32_0 : i32, i32
  }
  func.func @transform_3(%arg0: i32, %arg1: i32) -> (i32, i32, i32) {
    %c0_i32 = arith.constant 0 : i32
    %c0_i32_0 = arith.constant 0 : i32
    return %arg0, %c0_i32, %arg1 : i32, i32, i32
  }
  func.func @transform_4(%arg0: i32, %arg1: i32) -> (i32, i32, i32) {
    %c0_i32 = arith.constant 0 : i32
    %c0_i32_0 = arith.constant 0 : i32
    return %arg0, %c0_i32, %arg1 : i32, i32, i32
  }
  func.func @transform_5(%arg0: i32, %arg1: i32) -> (i32, i32, i32) {
    %c0_i32 = arith.constant 0 : i32
    %c0_i32_0 = arith.constant 0 : i32
    return %arg0, %c0_i32, %arg1 : i32, i32, i32
  }
}

</mosaic_0001>

<llo_original>
// kernel: tpu_custom_call.1
$region0: #{tpu_custom_call.1}
  #allocation0 [shape = 'u32[]', space=smem, size = 0x4, offset = 0x4, fixed_abs, tag = 'smem constant byte address 0x4 - core index']
  #allocation1 [shape = 'u32[144,128]{1,0:T(1,128)}', space=vmem, size = 0x12000, scoped, tag = 'internal scratch']
  %s0 = inlined_call_operand.hbm [shape: f32[1,8,256], index: 0, kind: input, shape index: {}]
  %s1 = inlined_call_operand.hbm [shape: f32[1,8,256], index: 1, kind: input, shape index: {}]
  %s2 = inlined_call_operand.hbm [shape: f32[8,13], index: 2, kind: input, shape index: {}]
  %s3 = inlined_call_operand.hbm [shape: f32[1,8,256], index: 3, kind: output, shape index: {0}]
  %s4 = inlined_call_operand.hbm [shape: f32[1,8,256], index: 4, kind: output, shape index: {1}]
  %s5 = inlined_call_operand.hbm [shape: f32[1,8,256], index: 5, kind: output, shape index: {2}]
  %6 = xla_tuple %s3, %s4, %s5
  %s7 = sld [smem:[#allocation0]]
  $region50: #{tpu_custom_call.1} parent=0
    _
  %s9 = ssub.s32 1, %s7
  %s10 = scalar_select 0, %s9, %s7
  $region1: #{tpu_custom_call.1} parent=0
    #allocation2 [shape = 'u8[8192]{0}', space=vmem, size = 0x2000, scoped, tag = 'input window, operand 0, single buffered']
    #allocation3 [shape = 's32[1]{0}', space=sflag, size = 0x4, scoped, tag = 'scoped memory for tpu_custom_call.1']
    #allocation4 [shape = 's32[1]{0}', space=sflag, size = 0x4, scoped, tag = 'scoped memory for tpu_custom_call.1']
    #allocation5 [shape = 'u8[8192]{0}', space=vmem, size = 0x2000, scoped, tag = 'input window, operand 1, single buffered']
    #allocation6 [shape = 's32[1]{0}', space=sflag, size = 0x4, scoped, tag = 'scoped memory for tpu_custom_call.1']
    #allocation7 [shape = 'u8[4096]{0}', space=vmem, size = 0x1000, scoped, tag = 'input window, operand 2, single buffered']
    #allocation8 [shape = 'u8[8192]{0}', space=vmem, size = 0x2000, scoped, tag = 'output window, operand 0, single buffered']
    #allocation9 [shape = 'u8[8192]{0}', space=vmem, size = 0x2000, scoped, tag = 'output window, operand 1, single buffered']
    #allocation10 [shape = 's32[1]{0}', space=sflag, size = 0x4, scoped, tag = 'scoped memory for tpu_custom_call.1']
    #allocation11 [shape = 'u8[8192]{0}', space=vmem, size = 0x2000, scoped, tag = 'output window, operand 2, single buffered']
    %11 = vsyncpa [#allocation3], 0
    %12 = vsyncpa [#allocation6], 0
    %13 = vsyncpa [#allocation4], 0
    %14 = vsyncpa [#allocation10], 0
    // Predicated region
    $region2: #{tpu_custom_call.1} parent=1 // pred_check
      _
    $region3: #{tpu_custom_call.1} parent=1 // pred_check_branch
      %16 = sbr.rel (0) target = $region5
    $region4: #{tpu_custom_call.1} parent=1 // pred_region
      %s18 = ssub.s32 256, 256
      %19 = vsyncadd [#allocation3], %s18
      %s21 = sshll.u32 [#allocation2], 4
      %s22 = int_to_ptr.vmem [resolvable:$true] %s21
      %24 = dma.hbm_to_vmem [thread:$0]  %s0, 256, %s22, [#allocation3]
    $region5: #{tpu_custom_call.1} parent=1 // pred_fallthru
      _
    // Predicated region
    $region6: #{tpu_custom_call.1} parent=1 // pred_check
      _
    $region7: #{tpu_custom_call.1} parent=1 // pred_check_branch
      %26 = sbr.rel (0) target = $region9
    $region8: #{tpu_custom_call.1} parent=1 // pred_region
      %s28 = ssub.s32 256, 256
      %29 = vsyncadd [#allocation6], %s28
      %s31 = sshll.u32 [#allocation5], 4
      %s32 = int_to_ptr.vmem [resolvable:$true] %s31
      %34 = dma.hbm_to_vmem [thread:$0]  %s1, 256, %s32, [#allocation6]
    $region9: #{tpu_custom_call.1} parent=1 // pred_fallthru
      _
    // Predicated region
    $region10: #{tpu_custom_call.1} parent=1 // pred_check
      _
    $region11: #{tpu_custom_call.1} parent=1 // pred_check_branch
      %36 = sbr.rel (0) target = $region13
    $region12: #{tpu_custom_call.1} parent=1 // pred_region
      %s38 = ssub.s32 128, 128
      %39 = vsyncadd [#allocation6], %s38
      %s41 = sshll.u32 [#allocation7], 4
      %s42 = int_to_ptr.vmem [resolvable:$true] %s41
      %44 = dma.hbm_to_vmem [thread:$0]  %s2, 128, %s42, [#allocation6]
    $region13: #{tpu_custom_call.1} parent=1 // pred_fallthru
      _
    // Predicated region
    $region14: #{tpu_custom_call.1} parent=1 // pred_check
      _
    $region15: #{tpu_custom_call.1} parent=1 // pred_check_branch
      %46 = sbr.rel (0) target = $region17
    $region16: #{tpu_custom_call.1} parent=1 // pred_region
      %47 = dma.done [#allocation3], 256
    $region17: #{tpu_custom_call.1} parent=1 // pred_fallthru
      _
    // Predicated region
    $region18: #{tpu_custom_call.1} parent=1 // pred_check
      _
    $region19: #{tpu_custom_call.1} parent=1 // pred_check_branch
      %49 = sbr.rel (0) target = $region21
    $region20: #{tpu_custom_call.1} parent=1 // pred_region
      %50 = dma.done [#allocation6], 256
    $region21: #{tpu_custom_call.1} parent=1 // pred_fallthru
      _
    // Predicated region
    $region22: #{tpu_custom_call.1} parent=1 // pred_check
      _
    $region23: #{tpu_custom_call.1} parent=1 // pred_check_branch
      %52 = sbr.rel (0) target = $region25
    $region24: #{tpu_custom_call.1} parent=1 // pred_region
      %53 = dma.done [#allocation6], 128
    $region25: #{tpu_custom_call.1} parent=1 // pred_fallthru
      _
    %v54 = vld [vmem:[#allocation7] sm:$0xff]
    %v55 = vld [vmem:[#allocation2] sm:$0xff]
    %v56 = vld [vmem:[#allocation2 + $0x8] sm:$0xff]
    %v57 = vld [vmem:[#allocation5] sm:$0xff]
    %v58 = vld [vmem:[#allocation5 + $0x8] sm:$0xff]
    %60 = vset.pattern.permute.xlu0 0
    %61 = vperm.xlu0 %60, %v54
    %v62 = vpop.permute.xlu0 %61
    %v64 = vsub.f32 %v55, %v62
    %v65 = vsub.f32 %v56, %v62
    %66 = vset.pattern.permute.xlu0 1
    %67 = vperm.xlu0 %66, %v54
    %v68 = vpop.permute.xlu0 %67
    %v70 = vmul.f32 %v64, %v68
    %v71 = vmul.f32 %v65, %v68
    %72 = vst [vmem:[#allocation9] sm:$0xff] %v70
    %73 = vst [vmem:[#allocation9 + $0x8] sm:$0xff] %v71
    %74 = vset.pattern.permute.xlu0 2
    %75 = vperm.xlu0 %74, %v54
    %v76 = vpop.permute.xlu0 %75
    %v78 = vsub.f32 %v57, %v76
    %v79 = vsub.f32 %v58, %v76
    %80 = vset.pattern.permute.xlu0 3
    %81 = vperm.xlu0 %80, %v54
    %v82 = vpop.permute.xlu0 %81
    %v84 = vmul.f32 %v78, %v82
    %v85 = vmul.f32 %v79, %v82
    %86 = vst [vmem:[#allocation11] sm:$0xff] %v84
    %87 = vst [vmem:[#allocation11 + $0x8] sm:$0xff] %v85
    %88 = vset.pattern.permute.xlu0 4
    %89 = vperm.xlu0 %88, %v54
    %v90 = vpop.permute.xlu0 %89
    %92 = vset.pattern.permute.xlu0 5
    %93 = vperm.xlu0 %92, %v54
    %v94 = vpop.permute.xlu0 %93
    %v96 = vlaneseq
    %v97 = vshrl.u32 %v96, 7
    %v98 = vsub.s32 0, %v97
    %v99 = vrot.slane %v55, %v98
    %v100 = vlaneseq
    %v101 = vshrl.u32 %v100, 7
    %v102 = vsub.s32 0, %v101
    %v103 = vrot.slane %v56, %v102
    %v104 = vmul.f32 %v94, %v99
    %v105 = vmul.f32 %v94, %v103
    %v106 = vadd.f32 %v90, %v104
    %v107 = vadd.f32 %v90, %v105
    %108 = vset.pattern.permute.xlu0 6
    %109 = vperm.xlu0 %108, %v54
    %v110 = vpop.permute.xlu0 %109
    %v112 = vlaneseq
    %v113 = vshrl.u32 %v112, 7
    %v114 = vsub.s32 1, %v113
    %v115 = vrot.slane %v55, %v114
    %v116 = vlaneseq
    %v117 = vshrl.u32 %v116, 7
    %v118 = vsub.s32 1, %v117
    %v119 = vrot.slane %v56, %v118
    %v120 = vmul.f32 %v110, %v115
    %v121 = vmul.f32 %v110, %v119
    %v122 = vadd.f32 %v106, %v120
    %v123 = vadd.f32 %v107, %v121
    %124 = vset.pattern.permute.xlu0 7
    %125 = vperm.xlu0 %124, %v54
    %v126 = vpop.permute.xlu0 %125
    %v128 = vlaneseq
    %v129 = vshrl.u32 %v128, 7
    %v130 = vsub.s32 2, %v129
    %v131 = vrot.slane %v55, %v130
    %v132 = vlaneseq
    %v133 = vshrl.u32 %v132, 7
    %v134 = vsub.s32 2, %v133
    %v135 = vrot.slane %v56, %v134
    %v136 = vmul.f32 %v126, %v131
    %v137 = vmul.f32 %v126, %v135
    %v138 = vadd.f32 %v122, %v136
    %v139 = vadd.f32 %v123, %v137
    %140 = vset.pattern.permute.xlu0 8
    %141 = vperm.xlu0 %140, %v54
    %v142 = vpop.permute.xlu0 %141
    %v144 = vlaneseq
    %v145 = vshrl.u32 %v144, 7
    %v146 = vsub.s32 3, %v145
    %v147 = vrot.slane %v55, %v146
    %v148 = vlaneseq
    %v149 = vshrl.u32 %v148, 7
    %v150 = vsub.s32 3, %v149
    %v151 = vrot.slane %v56, %v150
    %v152 = vmul.f32 %v142, %v147
    %v153 = vmul.f32 %v142, %v151
    %v154 = vadd.f32 %v138, %v152
    %v155 = vadd.f32 %v139, %v153
    %156 = vset.pattern.permute.xlu0 9
    %157 = vperm.xlu0 %156, %v54
    %v158 = vpop.permute.xlu0 %157
    %v160 = vlaneseq
    %v161 = vshrl.u32 %v160, 7
    %v162 = vsub.s32 4, %v161
    %v163 = vrot.slane %v55, %v162
    %v164 = vlaneseq
    %v165 = vshrl.u32 %v164, 7
    %v166 = vsub.s32 4, %v165
    %v167 = vrot.slane %v56, %v166
    %v168 = vmul.f32 %v158, %v163
    %v169 = vmul.f32 %v158, %v167
    %v170 = vadd.f32 %v154, %v168
    %v171 = vadd.f32 %v155, %v169
    %172 = vset.pattern.permute.xlu0 10
    %173 = vperm.xlu0 %172, %v54
    %v174 = vpop.permute.xlu0 %173
    %v176 = vlaneseq
    %v177 = vshrl.u32 %v176, 7
    %v178 = vsub.s32 5, %v177
    %v179 = vrot.slane %v55, %v178
    %v180 = vlaneseq
    %v181 = vshrl.u32 %v180, 7
    %v182 = vsub.s32 5, %v181
    %v183 = vrot.slane %v56, %v182
    %v184 = vmul.f32 %v174, %v179
    %v185 = vmul.f32 %v174, %v183
    %v186 = vadd.f32 %v170, %v184
    %v187 = vadd.f32 %v171, %v185
    %188 = vset.pattern.permute.xlu0 11
    %189 = vperm.xlu0 %188, %v54
    %v190 = vpop.permute.xlu0 %189
    %v192 = vlaneseq
    %v193 = vshrl.u32 %v192, 7
    %v194 = vsub.s32 6, %v193
    %v195 = vrot.slane %v55, %v194
    %v196 = vlaneseq
    %v197 = vshrl.u32 %v196, 7
    %v198 = vsub.s32 6, %v197
    %v199 = vrot.slane %v56, %v198
    %v200 = vmul.f32 %v190, %v195
    %v201 = vmul.f32 %v190, %v199
    %v202 = vadd.f32 %v186, %v200
    %v203 = vadd.f32 %v187, %v201
    %204 = vset.pattern.permute.xlu0 12
    %205 = vperm.xlu0 %204, %v54
    %v206 = vpop.permute.xlu0 %205
    %v208 = vlaneseq
    %v209 = vshrl.u32 %v208, 7
    %v210 = vsub.s32 7, %v209
    %v211 = vrot.slane %v55, %v210
    %v212 = vlaneseq
    %v213 = vshrl.u32 %v212, 7
    %v214 = vsub.s32 7, %v213
    %v215 = vrot.slane %v56, %v214
    %v216 = vmul.f32 %v206, %v211
    %v217 = vmul.f32 %v206, %v215
    %v218 = vadd.f32 %v202, %v216
    %v219 = vadd.f32 %v203, %v217
    %220 = vst [vmem:[#allocation8] sm:$0xff] %v218
    %221 = vst [vmem:[#allocation8 + $0x8] sm:$0xff] %v219
    // Predicated region
    $region26: #{tpu_custom_call.1} parent=1 // pred_check
      _
    $region27: #{tpu_custom_call.1} parent=1 // pred_check_branch
      %223 = sbr.rel (0) target = $region29
    $region28: #{tpu_custom_call.1} parent=1 // pred_region
      %s225 = ssub.s32 256, 256
      %226 = vsyncadd [#allocation4], %s225
      %s228 = sshll.u32 [#allocation8], 4
      %s229 = int_to_ptr.vmem [resolvable:$true] %s228
      %231 = dma.vmem_to_hbm [thread:$0]  %s229, 256, %s3, [#allocation4]
    $region29: #{tpu_custom_call.1} parent=1 // pred_fallthru
      _
    // Predicated region
    $region30: #{tpu_custom_call.1} parent=1 // pred_check
      _
    $region31: #{tpu_custom_call.1} parent=1 // pred_check_branch
      %233 = sbr.rel (0) target = $region33
    $region32: #{tpu_custom_call.1} parent=1 // pred_region
      %s235 = ssub.s32 256, 256
      %236 = vsyncadd [#allocation10], %s235
      %s238 = sshll.u32 [#allocation9], 4
      %s239 = int_to_ptr.vmem [resolvable:$true] %s238
      %241 = dma.vmem_to_hbm [thread:$0]  %s239, 256, %s4, [#allocation10]
    $region33: #{tpu_custom_call.1} parent=1 // pred_fallthru
      _
    // Predicated region
    $region34: #{tpu_custom_call.1} parent=1 // pred_check
      _
    $region35: #{tpu_custom_call.1} parent=1 // pred_check_branch
      %243 = sbr.rel (0) target = $region37
    $region36: #{tpu_custom_call.1} parent=1 // pred_region
      %s245 = ssub.s32 256, 256
      %246 = vsyncadd [#allocation10], %s245
      %s248 = sshll.u32 [#allocation11], 4
      %s249 = int_to_ptr.vmem [resolvable:$true] %s248
      %251 = dma.vmem_to_hbm [thread:$0]  %s249, 256, %s5, [#allocation10]
    $region37: #{tpu_custom_call.1} parent=1 // pred_fallthru
      _
    // Predicated region
    $region38: #{tpu_custom_call.1} parent=1 // pred_check
      _
    $region39: #{tpu_custom_call.1} parent=1 // pred_check_branch
      %253 = sbr.rel (0) target = $region41
    $region40: #{tpu_custom_call.1} parent=1 // pred_region
      %254 = dma.done [#allocation4], 256
    $region41: #{tpu_custom_call.1} parent=1 // pred_fallthru
      _
    // Predicated region
    $region42: #{tpu_custom_call.1} parent=1 // pred_check
      _
    $region43: #{tpu_custom_call.1} parent=1 // pred_check_branch
      %256 = sbr.rel (0) target = $region45
    $region44: #{tpu_custom_call.1} parent=1 // pred_region
      %257 = dma.done [#allocation10], 256
    $region45: #{tpu_custom_call.1} parent=1 // pred_fallthru
      _
    // Predicated region
    $region46: #{tpu_custom_call.1} parent=1 // pred_check
      _
    $region47: #{tpu_custom_call.1} parent=1 // pred_check_branch
      %259 = sbr.rel (0) target = $region49
    $region48: #{tpu_custom_call.1} parent=1 // pred_region
      %260 = dma.done [#allocation10], 256
    $region49: #{tpu_custom_call.1} parent=1 // pred_fallthru
      _
    %261 = vsyncpa [#allocation3], 1
    %262 = vsyncpa [#allocation6], 1
    %263 = vsyncpa [#allocation4], 1
    %264 = vsyncpa [#allocation10], 1

</llo_original>
